<compile_context>
chip_gen: v6e
topology: v6e:2x2x1
jax: 0.10.0
libtpu: 0.0.40
codegen_flags: <defaults>
</compile_context>

<pallas_src>
import functools

import jax
import jax.numpy as jnp
from jax.experimental import pallas as pl
from jax.experimental.pallas import tpu as pltpu


# ----------------------------------------------------------------------------
# Kernels
# ----------------------------------------------------------------------------
def _linear_relu_kernel_inplace(x_ref, w_ref, b_ref, o_ref):
    """f32 output doubles as the K-resident accumulator (no scratch copy)."""
    # x_ref: (tm, tk)   w_ref: (tk, tn)   b_ref: (1, tn)   o_ref: (tm, tn) f32
    k = pl.program_id(2)

    @pl.when(k == 0)
    def _init():
        o_ref[...] = jnp.zeros_like(o_ref)

    o_ref[...] += jnp.dot(
        x_ref[...], w_ref[...], preferred_element_type=jnp.float32
    )

    @pl.when(k == pl.num_programs(2) - 1)
    def _finalize():
        o_ref[...] = jnp.maximum(o_ref[...] + b_ref[...].astype(jnp.float32), 0.0)


def _linear_relu_kernel_scratch(x_ref, w_ref, b_ref, o_ref, acc_ref):
    """Variant for non-f32 outputs: separate f32 VMEM accumulator."""
    k = pl.program_id(2)

    @pl.when(k == 0)
    def _init():
        acc_ref[...] = jnp.zeros_like(acc_ref)

    acc_ref[...] += jnp.dot(
        x_ref[...], w_ref[...], preferred_element_type=jnp.float32
    )

    @pl.when(k == pl.num_programs(2) - 1)
    def _finalize():
        y = acc_ref[...] + b_ref[...].astype(jnp.float32)
        o_ref[...] = jnp.maximum(y, 0.0).astype(o_ref.dtype)


# ----------------------------------------------------------------------------
# Wrapper
# ----------------------------------------------------------------------------
def _round_up(a, b):
    return ((a + b - 1) // b) * b


_VMEM_LIMIT_CACHE = None


def _vmem_limit_bytes():
    """Generation-aware VMEM budget: ~75% of physical capacity."""
    global _VMEM_LIMIT_CACHE
    if _VMEM_LIMIT_CACHE is None:
        try:
            cap = int(pltpu.get_tpu_info().vmem_capacity_bytes)
        except Exception:
            cap = 64 * 1024 * 1024  # conservative fallback (v7x-sized)
        _VMEM_LIMIT_CACHE = max(32 * 1024 * 1024, (cap * 3) // 4)
    return _VMEM_LIMIT_CACHE


@functools.partial(jax.jit, static_argnames=("tm", "tn", "tk", "compute_dtype"))
def linear_block(x, weight, bias, *, tm=512, tn=512, tk=1024, compute_dtype=None):
    """Pallas equivalent of torch LinearBlock.forward: relu(x @ W.T + b).

    x:      [..., in_features]
    weight: [out_features, in_features]   (PyTorch nn.Linear convention)
    bias:   [out_features]
    compute_dtype: optional (e.g. jnp.bfloat16) MXU compute dtype; the
                   accumulator stays float32.
    """
    out_features, in_features = weight.shape
    lead_shape = x.shape[:-1]
    out_dtype = x.dtype

    x2d = x.reshape(-1, in_features)
    m = x2d.shape[0]

    if compute_dtype is not None:
        cdt = jnp.dtype(compute_dtype)
        x2d = x2d.astype(cdt)
        weight = weight.astype(cdt)
    else:
        cdt = jnp.dtype(x.dtype)

    # Sublane packing is dtype dependent: f32 -> 8 rows/vreg, bf16 -> 16,
    # int8/fp8 -> 32.  Lane dim stays 128-aligned.
    sublane = {4: 8, 2: 16, 1: 32}.get(cdt.itemsize, 8)

    tm_eff = min(_round_up(tm, sublane), _round_up(m, sublane))
    tn_eff = min(_round_up(tn, 128), _round_up(out_features, 128))
    tk_eff = min(_round_up(tk, 128), _round_up(in_features, 128))

    mp = _round_up(m, tm_eff)
    np_ = _round_up(out_features, tn_eff)
    kp = _round_up(in_features, tk_eff)

    # One wrapper-side transpose to [in, out]: the kernel then runs a
    # canonical (tm,tk)x(tk,tn) MXU matmul with no per-tile transposes.
    # TODO(synk): in production, pre-transpose/pre-pad W once outside the hot
    # path (amortized across calls) instead of per call.
    w = weight.T
    if (mp, kp) != (m, in_features):
        x2d = jnp.pad(x2d, ((0, mp - m), (0, kp - in_features)))
    if (kp, np_) != (in_features, out_features):
        w = jnp.pad(w, ((0, kp - in_features), (0, np_ - out_features)))
    b2d = bias.reshape(1, out_features)
    if np_ != out_features:
        b2d = jnp.pad(b2d, ((0, 0), (0, np_ - out_features)))

    grid = (mp // tm_eff, np_ // tn_eff, kp // tk_eff)

    in_specs = [
        pl.BlockSpec((tm_eff, tk_eff), lambda i, j, k: (i, k)),   # x tile
        pl.BlockSpec((tk_eff, tn_eff), lambda i, j, k: (k, j)),   # W tile ([in, out])
        pl.BlockSpec((1, tn_eff), lambda i, j, k: (0, j)),        # bias tile
    ]
    out_spec = pl.BlockSpec((tm_eff, tn_eff), lambda i, j, k: (i, j))

    if out_dtype == jnp.float32:
        # Output block is K-resident -> use it directly as the accumulator.
        kernel = _linear_relu_kernel_inplace
        scratch_shapes = []
    else:
        kernel = _linear_relu_kernel_scratch
        scratch_shapes = [pltpu.VMEM((tm_eff, tn_eff), jnp.float32)]

    out = pl.pallas_call(
        kernel,
        out_shape=jax.ShapeDtypeStruct((mp, np_), out_dtype),
        grid_spec=pltpu.PrefetchScalarGridSpec(
            num_scalar_prefetch=0,
            grid=grid,
            in_specs=in_specs,
            out_specs=out_spec,
            scratch_shapes=scratch_shapes,
        ),
        compiler_params=pltpu.CompilerParams(
            dimension_semantics=("parallel", "parallel", "arbitrary"),
            vmem_limit_bytes=_vmem_limit_bytes(),
        ),
    )(x2d, w, b2d)

    out = out[:m, :out_features]
    return out.reshape(*lead_shape, out_features)


# ----------------------------------------------------------------------------
# Self-test
# ----------------------------------------------------------------------------
if __name__ == "__main__":
    key = jax.random.PRNGKey(0)
    k_x, k_w, k_b, k_x2, k_w2, k_b2 = jax.random.split(key, 6)

    # --- Small demo consistent with the module (batch=8, 32 -> 32) ---------
    batch, in_planes, out_planes = 8, 32, 32
    bound = 1.0 / (in_planes ** 0.5)
    x = jax.random.normal(k_x, (batch, in_planes), dtype=jnp.float32)
    weight = jax.random.uniform(
        k_w, (out_planes, in_planes), minval=-bound, maxval=bound, dtype=jnp.float32)
    bias = jax.random.uniform(
        k_b, (out_planes,), minval=-bound, maxval=bound, dtype=jnp.float32)

    y = linear_block(x, weight, bias)
    jax.block_until_ready(y)

    y_ref = jnp.maximum(
        jnp.dot(x, weight.T, precision=jax.lax.Precision.HIGHEST) + bias, 0.0)
    assert y.shape == (batch, out_planes)
    assert jnp.allclose(y, y_ref, atol=1e-4, rtol=1e-4), "small-shape mismatch"

    # --- Multi-tile check: exercises the (M, N, K) grid + accumulator ------
    m2, in2, out2 = 384, 512, 256
    bound2 = 1.0 / (in2 ** 0.5)
    x2 = jax.random.normal(k_x2, (m2, in2), dtype=jnp.float32)
    w2 = jax.random.uniform(
        k_w2, (out2, in2), minval=-bound2, maxval=bound2, dtype=jnp.float32)
    b2 = jax.random.uniform(
        k_b2, (out2,), minval=-bound2, maxval=bound2, dtype=jnp.float32)

    y2 = linear_block(x2, w2, b2, tm=128, tn=128, tk=256)   # grid = (3, 2, 2)
    jax.block_until_ready(y2)

    y2_ref = jnp.maximum(
        jnp.dot(x2, w2.T, precision=jax.lax.Precision.HIGHEST) + b2, 0.0)
    assert y2.shape == (m2, out2)
    assert jnp.allclose(y2, y2_ref, atol=5e-3, rtol=5e-3), "tiled-shape mismatch"

    print("KERNEL_OK")
</pallas_src>

<mosaic_0001>
module attributes {stable_mosaic.version = 11 : i64} {
  func.func @_linear_relu_kernel_inplace(%arg0: i32, %arg1: i32, %arg2: i32, %arg3: memref<8x128xf32, #tpu.memory_space<vmem>>, %arg4: memref<128x128xf32, #tpu.memory_space<vmem>>, %arg5: memref<1x128xf32, #tpu.memory_space<vmem>>, %arg6: memref<8x128xf32, #tpu.memory_space<vmem>>) attributes {dimension_semantics = [#tpu.dimension_semantics<parallel>, #tpu.dimension_semantics<parallel>, #tpu.dimension_semantics<arbitrary>], iteration_bounds = array<i64: 1, 1, 1>, scalar_prefetch = 0 : i64, scratch_operands = 0 : i64, tpu.core_type = #tpu.core_type<tc>, window_params = [{transform_indices = @transform_0, window_bounds = array<i64: 8, 128>}, {transform_indices = @transform_1, window_bounds = array<i64: 128, 128>}, {transform_indices = @transform_2, window_bounds = array<i64: 1, 128>}, {transform_indices = @transform_3, window_bounds = array<i64: 8, 128>}]} {
    %c0_i32 = arith.constant 0 : i32
    %0 = arith.cmpi eq, %arg2, %c0_i32 : i32
    %1 = arith.extui %0 : i1 to i32
    %c0_i32_0 = arith.constant 0 : i32
    %2 = arith.cmpi ne, %1, %c0_i32_0 : i32
    scf.if %2 {
      %cst_10 = arith.constant 0.000000e+00 : f32
      %12 = vector.broadcast %cst_10 : f32 to vector<8x128xf32>
      %c0_11 = arith.constant 0 : index
      %c0_12 = arith.constant 0 : index
      %13 = vector.load %arg6[%c0_11, %c0_12] : memref<8x128xf32, #tpu.memory_space<vmem>>, vector<8x128xf32>
      tpu.vector_store %arg6[%c0_11, %c0_12], %12 {strides = array<i32>} : memref<8x128xf32, #tpu.memory_space<vmem>>, vector<8x128xf32>,
    } else {
    }
    %c0 = arith.constant 0 : index
    %c0_1 = arith.constant 0 : index
    %3 = vector.load %arg6[%c0, %c0_1] : memref<8x128xf32, #tpu.memory_space<vmem>>, vector<8x128xf32>
    %c0_2 = arith.constant 0 : index
    %c0_3 = arith.constant 0 : index
    %4 = vector.load %arg3[%c0_2, %c0_3] : memref<8x128xf32, #tpu.memory_space<vmem>>, vector<8x128xf32>
    %c0_4 = arith.constant 0 : index
    %c0_5 = arith.constant 0 : index
    %5 = vector.load %arg4[%c0_4, %c0_5] : memref<128x128xf32, #tpu.memory_space<vmem>>, vector<128x128xf32>
    %cst = arith.constant dense<0.000000e+00> : vector<8x128xf32>
    %6 = tpu.matmul %4, %5, %cst {dimension_numbers = #tpu.dot_dimension_numbers<[1], [0], [0], [1], [0, 0, 1, 1], [], []>} : vector<8x128xf32>, vector<128x128xf32>, vector<8x128xf32> -> vector<8x128xf32>
    %7 = arith.addf %3, %6 : vector<8x128xf32>
    %c0_6 = arith.constant 0 : index
    %c0_7 = arith.constant 0 : index
    %8 = vector.load %arg6[%c0_6, %c0_7] : memref<8x128xf32, #tpu.memory_space<vmem>>, vector<8x128xf32>
    tpu.vector_store %arg6[%c0_6, %c0_7], %7 {strides = array<i32>} : memref<8x128xf32, #tpu.memory_space<vmem>>, vector<8x128xf32>,
    %c0_i32_8 = arith.constant 0 : i32
    %9 = arith.cmpi eq, %arg2, %c0_i32_8 : i32
    %10 = arith.extui %9 : i1 to i32
    %c0_i32_9 = arith.constant 0 : i32
    %11 = arith.cmpi ne, %10, %c0_i32_9 : i32
    scf.if %11 {
      %c0_10 = arith.constant 0 : index
      %c0_11 = arith.constant 0 : index
      %12 = vector.load %arg6[%c0_10, %c0_11] : memref<8x128xf32, #tpu.memory_space<vmem>>, vector<8x128xf32>
      %c0_12 = arith.constant 0 : index
      %c0_13 = arith.constant 0 : index
      %13 = vector.load %arg5[%c0_12, %c0_13] : memref<1x128xf32, #tpu.memory_space<vmem>>, vector<1x128xf32>
      %14 = vector.broadcast %13 : vector<1x128xf32> to vector<8x128xf32>
      %15 = arith.addf %12, %14 : vector<8x128xf32>
      %cst_14 = arith.constant 0.000000e+00 : f32
      %16 = vector.broadcast %cst_14 : f32 to vector<8x128xf32>
      %17 = arith.maximumf %15, %16 : vector<8x128xf32>
      %c0_15 = arith.constant 0 : index
      %c0_16 = arith.constant 0 : index
      %18 = vector.load %arg6[%c0_15, %c0_16] : memref<8x128xf32, #tpu.memory_space<vmem>>, vector<8x128xf32>
      tpu.vector_store %arg6[%c0_15, %c0_16], %17 {strides = array<i32>} : memref<8x128xf32, #tpu.memory_space<vmem>>, vector<8x128xf32>,
    } else {
    }
    return
  }
  func.func @transform_0(%arg0: i32, %arg1: i32, %arg2: i32) -> (i32, i32) {
    %c0_i32 = arith.constant 0 : i32
    return %arg0, %arg2 : i32, i32
  }
  func.func @transform_1(%arg0: i32, %arg1: i32, %arg2: i32) -> (i32, i32) {
    %c0_i32 = arith.constant 0 : i32
    return %arg2, %arg1 : i32, i32
  }
  func.func @transform_2(%arg0: i32, %arg1: i32, %arg2: i32) -> (i32, i32) {
    %c0_i32 = arith.constant 0 : i32
    %c0_i32_0 = arith.constant 0 : i32
    return %c0_i32, %arg1 : i32, i32
  }
  func.func @transform_3(%arg0: i32, %arg1: i32, %arg2: i32) -> (i32, i32) {
    %c0_i32 = arith.constant 0 : i32
    return %arg0, %arg1 : i32, i32
  }
}

</mosaic_0001>

<llo_original>
// kernel: linear_block.1
$region0: #{linear_block.1}
  #allocation0 [shape = 'u32[]', space=smem, size = 0x4, offset = 0x4, fixed_abs, tag = 'smem constant byte address 0x4 - core index']
  #allocation1 [shape = 'u32[144,128]{1,0:T(1,128)}', space=vmem, size = 0x12000, scoped, tag = 'internal scratch']
  %s0 = inlined_call_operand.vmem [shape: f32[8,128], index: 0, kind: input, shape index: {}]
  %s1 = inlined_call_operand.vmem [shape: f32[128,128], index: 1, kind: input, shape index: {}]
  %s2 = inlined_call_operand.vmem [shape: f32[1,128], index: 2, kind: input, shape index: {}]
  %s3 = inlined_call_operand.hbm [shape: f32[8,128], index: 3, kind: output, shape index: {}]
  %s4 = sld [smem:[#allocation0]]
  $region30: #{linear_block.1} parent=0
    _
  %s6 = ssub.s32 1, %s4
  %s7 = scalar_select 0, %s6, %s4
  $region1: #{linear_block.1} parent=0
    #allocation2 [shape = 'u8[4096]{0}', space=vmem, size = 0x1000, scoped, tag = 'output window, operand 0, single buffered']
    #allocation3 [shape = 's32[1]{0}', space=sflag, size = 0x4, scoped, tag = 'scoped memory for linear_block.1']
    %8 = vsyncpa [#allocation3], 0
    // Predicated region
    $region2: #{linear_block.1} parent=1 // pred_check
      _
    $region3: #{linear_block.1} parent=1 // pred_check_branch
      %10 = sbr.rel (0) target = $region5
    $region4: #{linear_block.1} parent=1 // pred_region
      _
    $region5: #{linear_block.1} parent=1 // pred_fallthru
      _
    // Predicated region
    $region6: #{linear_block.1} parent=1 // pred_check
      _
    $region7: #{linear_block.1} parent=1 // pred_check_branch
      %12 = sbr.rel (0) target = $region9
    $region8: #{linear_block.1} parent=1 // pred_region
      _
    $region9: #{linear_block.1} parent=1 // pred_fallthru
      _
    // Predicated region
    $region10: #{linear_block.1} parent=1 // pred_check
      _
    $region11: #{linear_block.1} parent=1 // pred_check_branch
      %14 = sbr.rel (0) target = $region13
    $region12: #{linear_block.1} parent=1 // pred_region
      _
    $region13: #{linear_block.1} parent=1 // pred_fallthru
      _
    %p15 = scmp.eq.s32.totalorder 0, 0
    // Predicated region
    $region14: #{linear_block.1} parent=1 // pred_check
      %p16 = pneg %p15
    $region15: #{linear_block.1} parent=1 // pred_check_branch
      %18 = sbr.rel (%p16) target = $region17
    $region16: #{linear_block.1} parent=1 // pred_region
      %19 = vst [vmem:[#allocation2] sm:$0xff] 0.0
    $region17: #{linear_block.1} parent=1 // pred_fallthru
      _
    %v20 = vld [vmem:[#allocation2] sm:$0xff]
    %v21 = vld [vmem:[%s0] sm:$0xff]
    %v22 = vld [vmem:[%s1] sm:$0xff]
    %v23 = vld [vmem:[%s1 + $0x8] sm:$0xff]
    %v24 = vld [vmem:[%s1 + $0x10] sm:$0xff]
    %v25 = vld [vmem:[%s1 + $0x18] sm:$0xff]
    %v26 = vld [vmem:[%s1 + $0x20] sm:$0xff]
    %v27 = vld [vmem:[%s1 + $0x28] sm:$0xff]
    %v28 = vld [vmem:[%s1 + $0x30] sm:$0xff]
    %v29 = vld [vmem:[%s1 + $0x38] sm:$0xff]
    %v30 = vld [vmem:[%s1 + $0x40] sm:$0xff]
    %v31 = vld [vmem:[%s1 + $0x48] sm:$0xff]
    %v32 = vld [vmem:[%s1 + $0x50] sm:$0xff]
    %v33 = vld [vmem:[%s1 + $0x58] sm:$0xff]
    %v34 = vld [vmem:[%s1 + $0x60] sm:$0xff]
    %v35 = vld [vmem:[%s1 + $0x68] sm:$0xff]
    %v36 = vld [vmem:[%s1 + $0x70] sm:$0xff]
    %v37 = vld [vmem:[%s1 + $0x78] sm:$0xff]
    %38 = vmatprep.subr.mxu0 0.0
    %39 = vmatpush1.msra.mxu0 %v37
    %40 = vmatprep.subr.mxu0 0.0
    %41 = vmatpush1.msra.mxu0 %v36
    %42 = vmatprep.subr.mxu0 0.0
    %43 = vmatpush1.msra.mxu0 %v35
    %44 = vmatprep.subr.mxu0 0.0
    %45 = vmatpush1.msra.mxu0 %v34
    %46 = vmatprep.subr.mxu0 0.0
    %47 = vmatpush1.msra.mxu0 %v33
    %48 = vmatprep.subr.mxu0 0.0
    %49 = vmatpush1.msra.mxu0 %v32
    %50 = vmatprep.subr.mxu0 0.0
    %51 = vmatpush1.msra.mxu0 %v31
    %52 = vmatprep.subr.mxu0 0.0
    %53 = vmatpush1.msra.mxu0 %v30
    %54 = vmatprep.subr.mxu0 0.0
    %55 = vmatpush1.msra.mxu0 %v29
    %56 = vmatprep.subr.mxu0 0.0
    %57 = vmatpush1.msra.mxu0 %v28
    %58 = vmatprep.subr.mxu0 0.0
    %59 = vmatpush1.msra.mxu0 %v27
    %60 = vmatprep.subr.mxu0 0.0
    %61 = vmatpush1.msra.mxu0 %v26
    %62 = vmatprep.subr.mxu0 0.0
    %63 = vmatpush1.msra.mxu0 %v25
    %64 = vmatprep.subr.mxu0 0.0
    %65 = vmatpush1.msra.mxu0 %v24
    %66 = vmatprep.subr.mxu0 0.0
    %67 = vmatpush1.msra.mxu0 %v23
    %68 = vmatprep.subr.mxu0 0.0
    %69 = vmatpush1.msra.mxu0 %v22
    %70 = vmatprep.subr.mxu0 0.0
    %71 = vmatpush2.msra.mxu0 0.0
    %72 = vmatprep.subr.mxu0 0.0
    %73 = vmatpush2.msra.mxu0 0.0
    %74 = vmatprep.subr.mxu0 0.0
    %75 = vmatpush2.msra.mxu0 0.0
    %76 = vmatprep.subr.mxu0 0.0
    %77 = vmatpush2.msra.mxu0 0.0
    %78 = vmatprep.subr.mxu0 0.0
    %79 = vmatpush2.msra.mxu0 0.0
    %80 = vmatprep.subr.mxu0 0.0
    %81 = vmatpush2.msra.mxu0 0.0
    %82 = vmatprep.subr.mxu0 0.0
    %83 = vmatpush2.msra.mxu0 0.0
    %84 = vmatprep.subr.mxu0 0.0
    %85 = vmatpush2.msra.mxu0 0.0
    %86 = vmatprep.subr.mxu0 0.0
    %87 = vmatpush2.msra.mxu0 0.0
    %88 = vmatprep.subr.mxu0 0.0
    %89 = vmatpush2.msra.mxu0 0.0
    %90 = vmatprep.subr.mxu0 0.0
    %91 = vmatpush2.msra.mxu0 0.0
    %92 = vmatprep.subr.mxu0 0.0
    %93 = vmatpush2.msra.mxu0 0.0
    %94 = vmatprep.subr.mxu0 0.0
    %95 = vmatpush2.msra.mxu0 0.0
    %96 = vmatprep.subr.mxu0 0.0
    %97 = vmatpush2.msra.mxu0 0.0
    %98 = vmatprep.subr.mxu0 0.0
    %99 = vmatpush2.msra.mxu0 0.0
    %100 = vmatprep.subr.mxu0 0.0
    %101 = vmatpush2.msra.mxu0 0.0
    %102 = vmatprep.mubr.f32.mxu0 0.0
    %103 = vmatmul.mubr.f32.gmra.mxu0 %v21
    %v104 = vpop.f32.mrf.mxu0
    %v105 = vadd.f32 0.0, %v104
    %v106 = vpop.f32.mrf.mxu0
    %107 = vdwg.mxu0
    %v108 = vadd.f32 %v20, %v105
    %109 = vst [vmem:[#allocation2] sm:$0xff] %v108
    // Predicated region
    $region18: #{linear_block.1} parent=1 // pred_check
      %p110 = pneg %p15
    $region19: #{linear_block.1} parent=1 // pred_check_branch
      %112 = sbr.rel (%p110) target = $region21
    $region20: #{linear_block.1} parent=1 // pred_region
      %v113 = vld [vmem:[#allocation2] sm:$0xff]
      %v114 = vld [vmem:[%s2] sm:$0x1]
      %v116 = vlaneseq
      %v117 = vshrl.u32 %v116, 7
      %v118 = vsub.s32 0, %v117
      %v119 = vrot.slane %v114, %v118
      %v121 = vadd.f32 %v113, %v119
      %v122 = vmax.f32 %v121, 0.0
      %123 = vst [vmem:[#allocation2] sm:$0xff] %v122
    $region21: #{linear_block.1} parent=1 // pred_fallthru
      _
    // Predicated region
    $region22: #{linear_block.1} parent=1 // pred_check
      _
    $region23: #{linear_block.1} parent=1 // pred_check_branch
      %125 = sbr.rel (0) target = $region25
    $region24: #{linear_block.1} parent=1 // pred_region
      %s127 = ssub.s32 128, 128
      %128 = vsyncadd [#allocation3], %s127
      %s130 = sshll.u32 [#allocation2], 4
      %s131 = int_to_ptr.vmem [resolvable:$true] %s130
      %133 = dma.vmem_to_hbm [thread:$0]  %s131, 128, %s3, [#allocation3]
    $region25: #{linear_block.1} parent=1 // pred_fallthru
      _
    // Predicated region
    $region26: #{linear_block.1} parent=1 // pred_check
      _
    $region27: #{linear_block.1} parent=1 // pred_check_branch
      %135 = sbr.rel (0) target = $region29
    $region28: #{linear_block.1} parent=1 // pred_region
      %136 = dma.done [#allocation3], 128
    $region29: #{linear_block.1} parent=1 // pred_fallthru
      _
    %137 = vsyncpa [#allocation3], 1

</llo_original>
